<compile_context>
chip_gen: v7x
topology: tpu7x:2x2x1
jax: 0.10.0
libtpu: 0.0.40
codegen_flags: <defaults>
</compile_context>

<pallas_src>
import math

import jax
import jax.numpy as jnp
import numpy as np
from jax.experimental import pallas as pl
from jax.experimental.pallas import tpu as pltpu


# TODO(synk): PyTorch nn.GELU() defaults to the exact erf formulation; we use
# the tanh-approximate GELU since lax.erf lowering is not guaranteed in Mosaic.
def _gelu(x):
    return jax.nn.gelu(x, approximate=True)


def _ae_decoder_kernel(x_ref,
                       w0_ref, b0_ref, w1_ref, b1_ref, w2_ref, b2_ref,
                       w3_ref, b3_ref, w4_ref, b4_ref, w5_ref, b5_ref,
                       out_ref):
    def dense(h, w_ref, b_ref):
        return (jnp.dot(h, w_ref[...], preferred_element_type=jnp.float32)
                + b_ref[...])

    h = x_ref[...]                                   # [tb, latent_dim] f32
    h = _gelu(dense(h, w0_ref, b0_ref))              # [tb, 32]
    h = _gelu(dense(h, w1_ref, b1_ref))              # [tb, 64]
    h = _gelu(dense(h, w2_ref, b2_ref))              # [tb, 128]
    h = _gelu(dense(h, w3_ref, b3_ref))              # [tb, 256]
    h = _gelu(dense(h, w4_ref, b4_ref))              # [tb, 512]
    out_ref[...] = dense(h, w5_ref, b5_ref).astype(out_ref.dtype)   # [tb, out]


def ae_decoder_forward(x, params, *, batch_tile=None):
    """x: [B, latent_dim] f32. params: list of (W [in,out], b [1,out]).
    Returns [B, output_dim] f32."""
    B, latent_dim = x.shape
    out_dim = params[-1][0].shape[1]

    if batch_tile is None:
        batch_tile = B if B <= 512 else 512

    # Pad the batch to a multiple of the tile (wrapper-side layout plumbing).
    grid_b = pl.cdiv(B, batch_tile)
    B_pad = grid_b * batch_tile
    x_in = x if B_pad == B else jnp.pad(x, ((0, B_pad - B), (0, 0)))

    flat_params = []
    in_specs = [pl.BlockSpec((batch_tile, latent_dim), lambda i: (i, 0))]
    for w, b in params:
        flat_params += [w, b]
        # Full-array, grid-invariant blocks: weights/biases stay in VMEM for
        # the whole call (only the batch tile is re-DMA'd per grid step).
        in_specs.append(pl.BlockSpec(w.shape, lambda i: (0, 0)))
        in_specs.append(pl.BlockSpec(b.shape, lambda i: (0, 0)))

    out = pl.pallas_call(
        _ae_decoder_kernel,
        out_shape=jax.ShapeDtypeStruct((B_pad, out_dim), jnp.float32),
        grid_spec=pltpu.PrefetchScalarGridSpec(
            num_scalar_prefetch=0,
            grid=(grid_b,),
            in_specs=in_specs,
            out_specs=pl.BlockSpec((batch_tile, out_dim), lambda i: (i, 0)),
        ),
        compiler_params=pltpu.CompilerParams(
            dimension_semantics=("parallel",)),   # v7x: split batch across TCs
    )(x_in, *flat_params)

    return out if B_pad == B else out[:B]


def init_params(key, latent_dim=3, output_dim=128,
                feats=(32, 64, 128, 256, 512)):
    """PyTorch nn.Linear default init (U(-1/sqrt(fan_in), 1/sqrt(fan_in)));
    W stored transposed as [in, out], bias as [1, out] for the kernel."""
    dims = (latent_dim,) + tuple(feats) + (output_dim,)
    keys = jax.random.split(key, 2 * (len(dims) - 1))
    params = []
    for idx, (fan_in, fan_out) in enumerate(zip(dims[:-1], dims[1:])):
        bound = 1.0 / math.sqrt(fan_in)
        w = jax.random.uniform(keys[2 * idx], (fan_in, fan_out),
                               jnp.float32, -bound, bound)
        b = jax.random.uniform(keys[2 * idx + 1], (1, fan_out),
                               jnp.float32, -bound, bound)
        params.append((w, b))
    return params


def reference_forward(x, params):
    """Pure-JAX reference with identical semantics for verification."""
    h = x
    for w, b in params[:-1]:
        h = _gelu(h @ w + b)
    w, b = params[-1]
    return h @ w + b


if __name__ == "__main__":
    B, latent_dim, output_dim = 8, 3, 128
    key = jax.random.PRNGKey(0)
    k_x, k_p = jax.random.split(key)
    x = jax.random.normal(k_x, (B, latent_dim), jnp.float32)
    params = init_params(k_p, latent_dim=latent_dim, output_dim=output_dim)

    out = jax.block_until_ready(ae_decoder_forward(x, params))
    ref = jax.block_until_ready(reference_forward(x, params))

    np.testing.assert_allclose(np.asarray(out), np.asarray(ref),
                               rtol=1e-2, atol=2e-2)
    print("KERNEL_OK")
</pallas_src>

<mosaic_0001>
module attributes {stable_mosaic.version = 11 : i64} {
  func.func @_ae_decoder_kernel(%arg0: i32, %arg1: memref<8x3xf32, #tpu.memory_space<vmem>>, %arg2: memref<3x32xf32, #tpu.memory_space<vmem>>, %arg3: memref<1x32xf32, #tpu.memory_space<vmem>>, %arg4: memref<32x64xf32, #tpu.memory_space<vmem>>, %arg5: memref<1x64xf32, #tpu.memory_space<vmem>>, %arg6: memref<64x128xf32, #tpu.memory_space<vmem>>, %arg7: memref<1x128xf32, #tpu.memory_space<vmem>>, %arg8: memref<128x256xf32, #tpu.memory_space<vmem>>, %arg9: memref<1x256xf32, #tpu.memory_space<vmem>>, %arg10: memref<256x512xf32, #tpu.memory_space<vmem>>, %arg11: memref<1x512xf32, #tpu.memory_space<vmem>>, %arg12: memref<512x128xf32, #tpu.memory_space<vmem>>, %arg13: memref<1x128xf32, #tpu.memory_space<vmem>>, %arg14: memref<8x128xf32, #tpu.memory_space<vmem>>) attributes {dimension_semantics = [#tpu.dimension_semantics<parallel>], iteration_bounds = array<i64: 1>, scalar_prefetch = 0 : i64, scratch_operands = 0 : i64, tpu.core_type = #tpu.core_type<tc>, window_params = [{transform_indices = @transform_0, window_bounds = array<i64: 8, 3>}, {pipeline_mode = #tpu.pipeline_mode<synchronous>, transform_indices = @transform_1, window_bounds = array<i64: 3, 32>}, {pipeline_mode = #tpu.pipeline_mode<synchronous>, transform_indices = @transform_2, window_bounds = array<i64: 1, 32>}, {pipeline_mode = #tpu.pipeline_mode<synchronous>, transform_indices = @transform_3, window_bounds = array<i64: 32, 64>}, {pipeline_mode = #tpu.pipeline_mode<synchronous>, transform_indices = @transform_4, window_bounds = array<i64: 1, 64>}, {pipeline_mode = #tpu.pipeline_mode<synchronous>, transform_indices = @transform_5, window_bounds = array<i64: 64, 128>}, {pipeline_mode = #tpu.pipeline_mode<synchronous>, transform_indices = @transform_6, window_bounds = array<i64: 1, 128>}, {pipeline_mode = #tpu.pipeline_mode<synchronous>, transform_indices = @transform_7, window_bounds = array<i64: 128, 256>}, {pipeline_mode = #tpu.pipeline_mode<synchronous>, transform_indices = @transform_8, window_bounds = array<i64: 1, 256>}, {pipeline_mode = #tpu.pipeline_mode<synchronous>, transform_indices = @transform_9, window_bounds = array<i64: 256, 512>}, {pipeline_mode = #tpu.pipeline_mode<synchronous>, transform_indices = @transform_10, window_bounds = array<i64: 1, 512>}, {pipeline_mode = #tpu.pipeline_mode<synchronous>, transform_indices = @transform_11, window_bounds = array<i64: 512, 128>}, {pipeline_mode = #tpu.pipeline_mode<synchronous>, transform_indices = @transform_12, window_bounds = array<i64: 1, 128>}, {transform_indices = @transform_13, window_bounds = array<i64: 8, 128>}]} {
    %c0 = arith.constant 0 : index
    %c0_0 = arith.constant 0 : index
    %0 = vector.load %arg1[%c0, %c0_0] : memref<8x3xf32, #tpu.memory_space<vmem>>, vector<8x3xf32>
    %c0_1 = arith.constant 0 : index
    %c0_2 = arith.constant 0 : index
    %1 = vector.load %arg2[%c0_1, %c0_2] : memref<3x32xf32, #tpu.memory_space<vmem>>, vector<3x32xf32>
    %cst = arith.constant dense<0.000000e+00> : vector<8x32xf32>
    %2 = tpu.matmul %0, %1, %cst {dimension_numbers = #tpu.dot_dimension_numbers<[1], [0], [0], [1], [0, 0, 1, 1], [], []>} : vector<8x3xf32>, vector<3x32xf32>, vector<8x32xf32> -> vector<8x32xf32>
    %c0_3 = arith.constant 0 : index
    %c0_4 = arith.constant 0 : index
    %3 = vector.load %arg3[%c0_3, %c0_4] : memref<1x32xf32, #tpu.memory_space<vmem>>, vector<1x32xf32>
    %4 = vector.broadcast %3 : vector<1x32xf32> to vector<8x32xf32>
    %5 = arith.addf %2, %4 : vector<8x32xf32>
    %6 = arith.mulf %5, %5 : vector<8x32xf32>
    %7 = arith.mulf %5, %6 : vector<8x32xf32>
    %cst_5 = arith.constant 4.471500e-02 : f32
    %8 = vector.broadcast %cst_5 : f32 to vector<8x32xf32>
    %9 = arith.mulf %8, %7 : vector<8x32xf32>
    %10 = arith.addf %5, %9 : vector<8x32xf32>
    %cst_6 = arith.constant 0.797884583 : f32
    %11 = vector.broadcast %cst_6 : f32 to vector<8x32xf32>
    %12 = arith.mulf %11, %10 : vector<8x32xf32>
    %13 = math.tanh %12 : vector<8x32xf32>
    %cst_7 = arith.constant 1.000000e+00 : f32
    %14 = vector.broadcast %cst_7 : f32 to vector<8x32xf32>
    %15 = arith.addf %14, %13 : vector<8x32xf32>
    %cst_8 = arith.constant 5.000000e-01 : f32
    %16 = vector.broadcast %cst_8 : f32 to vector<8x32xf32>
    %17 = arith.mulf %16, %15 : vector<8x32xf32>
    %18 = arith.mulf %5, %17 : vector<8x32xf32>
    %c0_9 = arith.constant 0 : index
    %c0_10 = arith.constant 0 : index
    %19 = vector.load %arg4[%c0_9, %c0_10] : memref<32x64xf32, #tpu.memory_space<vmem>>, vector<32x64xf32>
    %cst_11 = arith.constant dense<0.000000e+00> : vector<8x64xf32>
    %20 = tpu.matmul %18, %19, %cst_11 {dimension_numbers = #tpu.dot_dimension_numbers<[1], [0], [0], [1], [0, 0, 1, 1], [], []>} : vector<8x32xf32>, vector<32x64xf32>, vector<8x64xf32> -> vector<8x64xf32>
    %c0_12 = arith.constant 0 : index
    %c0_13 = arith.constant 0 : index
    %21 = vector.load %arg5[%c0_12, %c0_13] : memref<1x64xf32, #tpu.memory_space<vmem>>, vector<1x64xf32>
    %22 = vector.broadcast %21 : vector<1x64xf32> to vector<8x64xf32>
    %23 = arith.addf %20, %22 : vector<8x64xf32>
    %24 = arith.mulf %23, %23 : vector<8x64xf32>
    %25 = arith.mulf %23, %24 : vector<8x64xf32>
    %cst_14 = arith.constant 4.471500e-02 : f32
    %26 = vector.broadcast %cst_14 : f32 to vector<8x64xf32>
    %27 = arith.mulf %26, %25 : vector<8x64xf32>
    %28 = arith.addf %23, %27 : vector<8x64xf32>
    %cst_15 = arith.constant 0.797884583 : f32
    %29 = vector.broadcast %cst_15 : f32 to vector<8x64xf32>
    %30 = arith.mulf %29, %28 : vector<8x64xf32>
    %31 = math.tanh %30 : vector<8x64xf32>
    %cst_16 = arith.constant 1.000000e+00 : f32
    %32 = vector.broadcast %cst_16 : f32 to vector<8x64xf32>
    %33 = arith.addf %32, %31 : vector<8x64xf32>
    %cst_17 = arith.constant 5.000000e-01 : f32
    %34 = vector.broadcast %cst_17 : f32 to vector<8x64xf32>
    %35 = arith.mulf %34, %33 : vector<8x64xf32>
    %36 = arith.mulf %23, %35 : vector<8x64xf32>
    %c0_18 = arith.constant 0 : index
    %c0_19 = arith.constant 0 : index
    %37 = vector.load %arg6[%c0_18, %c0_19] : memref<64x128xf32, #tpu.memory_space<vmem>>, vector<64x128xf32>
    %cst_20 = arith.constant dense<0.000000e+00> : vector<8x128xf32>
    %38 = tpu.matmul %36, %37, %cst_20 {dimension_numbers = #tpu.dot_dimension_numbers<[1], [0], [0], [1], [0, 0, 1, 1], [], []>} : vector<8x64xf32>, vector<64x128xf32>, vector<8x128xf32> -> vector<8x128xf32>
    %c0_21 = arith.constant 0 : index
    %c0_22 = arith.constant 0 : index
    %39 = vector.load %arg7[%c0_21, %c0_22] : memref<1x128xf32, #tpu.memory_space<vmem>>, vector<1x128xf32>
    %40 = vector.broadcast %39 : vector<1x128xf32> to vector<8x128xf32>
    %41 = arith.addf %38, %40 : vector<8x128xf32>
    %42 = arith.mulf %41, %41 : vector<8x128xf32>
    %43 = arith.mulf %41, %42 : vector<8x128xf32>
    %cst_23 = arith.constant 4.471500e-02 : f32
    %44 = vector.broadcast %cst_23 : f32 to vector<8x128xf32>
    %45 = arith.mulf %44, %43 : vector<8x128xf32>
    %46 = arith.addf %41, %45 : vector<8x128xf32>
    %cst_24 = arith.constant 0.797884583 : f32
    %47 = vector.broadcast %cst_24 : f32 to vector<8x128xf32>
    %48 = arith.mulf %47, %46 : vector<8x128xf32>
    %49 = math.tanh %48 : vector<8x128xf32>
    %cst_25 = arith.constant 1.000000e+00 : f32
    %50 = vector.broadcast %cst_25 : f32 to vector<8x128xf32>
    %51 = arith.addf %50, %49 : vector<8x128xf32>
    %cst_26 = arith.constant 5.000000e-01 : f32
    %52 = vector.broadcast %cst_26 : f32 to vector<8x128xf32>
    %53 = arith.mulf %52, %51 : vector<8x128xf32>
    %54 = arith.mulf %41, %53 : vector<8x128xf32>
    %c0_27 = arith.constant 0 : index
    %c0_28 = arith.constant 0 : index
    %55 = vector.load %arg8[%c0_27, %c0_28] : memref<128x256xf32, #tpu.memory_space<vmem>>, vector<128x256xf32>
    %cst_29 = arith.constant dense<0.000000e+00> : vector<8x256xf32>
    %56 = tpu.matmul %54, %55, %cst_29 {dimension_numbers = #tpu.dot_dimension_numbers<[1], [0], [0], [1], [0, 0, 1, 1], [], []>} : vector<8x128xf32>, vector<128x256xf32>, vector<8x256xf32> -> vector<8x256xf32>
    %c0_30 = arith.constant 0 : index
    %c0_31 = arith.constant 0 : index
    %57 = vector.load %arg9[%c0_30, %c0_31] : memref<1x256xf32, #tpu.memory_space<vmem>>, vector<1x256xf32>
    %58 = vector.broadcast %57 : vector<1x256xf32> to vector<8x256xf32>
    %59 = arith.addf %56, %58 : vector<8x256xf32>
    %60 = arith.mulf %59, %59 : vector<8x256xf32>
    %61 = arith.mulf %59, %60 : vector<8x256xf32>
    %cst_32 = arith.constant 4.471500e-02 : f32
    %62 = vector.broadcast %cst_32 : f32 to vector<8x256xf32>
    %63 = arith.mulf %62, %61 : vector<8x256xf32>
    %64 = arith.addf %59, %63 : vector<8x256xf32>
    %cst_33 = arith.constant 0.797884583 : f32
    %65 = vector.broadcast %cst_33 : f32 to vector<8x256xf32>
    %66 = arith.mulf %65, %64 : vector<8x256xf32>
    %67 = math.tanh %66 : vector<8x256xf32>
    %cst_34 = arith.constant 1.000000e+00 : f32
    %68 = vector.broadcast %cst_34 : f32 to vector<8x256xf32>
    %69 = arith.addf %68, %67 : vector<8x256xf32>
    %cst_35 = arith.constant 5.000000e-01 : f32
    %70 = vector.broadcast %cst_35 : f32 to vector<8x256xf32>
    %71 = arith.mulf %70, %69 : vector<8x256xf32>
    %72 = arith.mulf %59, %71 : vector<8x256xf32>
    %c0_36 = arith.constant 0 : index
    %c0_37 = arith.constant 0 : index
    %73 = vector.load %arg10[%c0_36, %c0_37] : memref<256x512xf32, #tpu.memory_space<vmem>>, vector<256x512xf32>
    %cst_38 = arith.constant dense<0.000000e+00> : vector<8x512xf32>
    %74 = tpu.matmul %72, %73, %cst_38 {dimension_numbers = #tpu.dot_dimension_numbers<[1], [0], [0], [1], [0, 0, 1, 1], [], []>} : vector<8x256xf32>, vector<256x512xf32>, vector<8x512xf32> -> vector<8x512xf32>
    %c0_39 = arith.constant 0 : index
    %c0_40 = arith.constant 0 : index
    %75 = vector.load %arg11[%c0_39, %c0_40] : memref<1x512xf32, #tpu.memory_space<vmem>>, vector<1x512xf32>
    %76 = vector.broadcast %75 : vector<1x512xf32> to vector<8x512xf32>
    %77 = arith.addf %74, %76 : vector<8x512xf32>
    %78 = arith.mulf %77, %77 : vector<8x512xf32>
    %79 = arith.mulf %77, %78 : vector<8x512xf32>
    %cst_41 = arith.constant 4.471500e-02 : f32
    %80 = vector.broadcast %cst_41 : f32 to vector<8x512xf32>
    %81 = arith.mulf %80, %79 : vector<8x512xf32>
    %82 = arith.addf %77, %81 : vector<8x512xf32>
    %cst_42 = arith.constant 0.797884583 : f32
    %83 = vector.broadcast %cst_42 : f32 to vector<8x512xf32>
    %84 = arith.mulf %83, %82 : vector<8x512xf32>
    %85 = math.tanh %84 : vector<8x512xf32>
    %cst_43 = arith.constant 1.000000e+00 : f32
    %86 = vector.broadcast %cst_43 : f32 to vector<8x512xf32>
    %87 = arith.addf %86, %85 : vector<8x512xf32>
    %cst_44 = arith.constant 5.000000e-01 : f32
    %88 = vector.broadcast %cst_44 : f32 to vector<8x512xf32>
    %89 = arith.mulf %88, %87 : vector<8x512xf32>
    %90 = arith.mulf %77, %89 : vector<8x512xf32>
    %c0_45 = arith.constant 0 : index
    %c0_46 = arith.constant 0 : index
    %91 = vector.load %arg12[%c0_45, %c0_46] : memref<512x128xf32, #tpu.memory_space<vmem>>, vector<512x128xf32>
    %cst_47 = arith.constant dense<0.000000e+00> : vector<8x128xf32>
    %92 = tpu.matmul %90, %91, %cst_47 {dimension_numbers = #tpu.dot_dimension_numbers<[1], [0], [0], [1], [0, 0, 1, 1], [], []>} : vector<8x512xf32>, vector<512x128xf32>, vector<8x128xf32> -> vector<8x128xf32>
    %c0_48 = arith.constant 0 : index
    %c0_49 = arith.constant 0 : index
    %93 = vector.load %arg13[%c0_48, %c0_49] : memref<1x128xf32, #tpu.memory_space<vmem>>, vector<1x128xf32>
    %94 = vector.broadcast %93 : vector<1x128xf32> to vector<8x128xf32>
    %95 = arith.addf %92, %94 : vector<8x128xf32>
    %c0_50 = arith.constant 0 : index
    %c0_51 = arith.constant 0 : index
    %96 = vector.load %arg14[%c0_50, %c0_51] : memref<8x128xf32, #tpu.memory_space<vmem>>, vector<8x128xf32>
    tpu.vector_store %arg14[%c0_50, %c0_51], %95 {strides = array<i32>} : memref<8x128xf32, #tpu.memory_space<vmem>>, vector<8x128xf32>,
    return
  }
  func.func @transform_0(%arg0: i32) -> (i32, i32) {
    %c0_i32 = arith.constant 0 : i32
    %c0_i32_0 = arith.constant 0 : i32
    return %arg0, %c0_i32 : i32, i32
  }
  func.func @transform_1(%arg0: i32) -> (i32, i32) {
    %c0_i32 = arith.constant 0 : i32
    %c0_i32_0 = arith.constant 0 : i32
    %c0_i32_1 = arith.constant 0 : i32
    return %c0_i32, %c0_i32_0 : i32, i32
  }
  func.func @transform_2(%arg0: i32) -> (i32, i32) {
    %c0_i32 = arith.constant 0 : i32
    %c0_i32_0 = arith.constant 0 : i32
    %c0_i32_1 = arith.constant 0 : i32
    return %c0_i32, %c0_i32_0 : i32, i32
  }
  func.func @transform_3(%arg0: i32) -> (i32, i32) {
    %c0_i32 = arith.constant 0 : i32
    %c0_i32_0 = arith.constant 0 : i32
    %c0_i32_1 = arith.constant 0 : i32
    return %c0_i32, %c0_i32_0 : i32, i32
  }
  func.func @transform_4(%arg0: i32) -> (i32, i32) {
    %c0_i32 = arith.constant 0 : i32
    %c0_i32_0 = arith.constant 0 : i32
    %c0_i32_1 = arith.constant 0 : i32
    return %c0_i32, %c0_i32_0 : i32, i32
  }
  func.func @transform_5(%arg0: i32) -> (i32, i32) {
    %c0_i32 = arith.constant 0 : i32
    %c0_i32_0 = arith.constant 0 : i32
    %c0_i32_1 = arith.constant 0 : i32
    return %c0_i32, %c0_i32_0 : i32, i32
  }
  func.func @transform_6(%arg0: i32) -> (i32, i32) {
    %c0_i32 = arith.constant 0 : i32
    %c0_i32_0 = arith.constant 0 : i32
    %c0_i32_1 = arith.constant 0 : i32
    return %c0_i32, %c0_i32_0 : i32, i32
  }
  func.func @transform_7(%arg0: i32) -> (i32, i32) {
    %c0_i32 = arith.constant 0 : i32
    %c0_i32_0 = arith.constant 0 : i32
    %c0_i32_1 = arith.constant 0 : i32
    return %c0_i32, %c0_i32_0 : i32, i32
  }
  func.func @transform_8(%arg0: i32) -> (i32, i32) {
    %c0_i32 = arith.constant 0 : i32
    %c0_i32_0 = arith.constant 0 : i32
    %c0_i32_1 = arith.constant 0 : i32
    return %c0_i32, %c0_i32_0 : i32, i32
  }
  func.func @transform_9(%arg0: i32) -> (i32, i32) {
    %c0_i32 = arith.constant 0 : i32
    %c0_i32_0 = arith.constant 0 : i32
    %c0_i32_1 = arith.constant 0 : i32
    return %c0_i32, %c0_i32_0 : i32, i32
  }
  func.func @transform_10(%arg0: i32) -> (i32, i32) {
    %c0_i32 = arith.constant 0 : i32
    %c0_i32_0 = arith.constant 0 : i32
    %c0_i32_1 = arith.constant 0 : i32
    return %c0_i32, %c0_i32_0 : i32, i32
  }
  func.func @transform_11(%arg0: i32) -> (i32, i32) {
    %c0_i32 = arith.constant 0 : i32
    %c0_i32_0 = arith.constant 0 : i32
    %c0_i32_1 = arith.constant 0 : i32
    return %c0_i32, %c0_i32_0 : i32, i32
  }
  func.func @transform_12(%arg0: i32) -> (i32, i32) {
    %c0_i32 = arith.constant 0 : i32
    %c0_i32_0 = arith.constant 0 : i32
    %c0_i32_1 = arith.constant 0 : i32
    return %c0_i32, %c0_i32_0 : i32, i32
  }
  func.func @transform_13(%arg0: i32) -> (i32, i32) {
    %c0_i32 = arith.constant 0 : i32
    %c0_i32_0 = arith.constant 0 : i32
    return %arg0, %c0_i32 : i32, i32
  }
}

</mosaic_0001>

<llo_original>
// kernel: tpu_custom_call.1
$region0: #{tpu_custom_call.1}
  #allocation0 [shape = 'u32[]', space=smem, size = 0x4, offset = 0x4, fixed_abs, tag = 'smem constant byte address 0x4 - core index']
  #allocation1 [shape = 'u32[144,128]{1,0:T(1,128)}', space=vmem, size = 0x12000, scoped, tag = 'internal scratch']
  %s0 = inlined_call_operand.vmem [shape: f32[8,3], index: 0, kind: input, shape index: {}]
  %s1 = inlined_call_operand.vmem [shape: f32[3,32], index: 1, kind: input, shape index: {}]
  %s2 = inlined_call_operand.vmem [shape: f32[1,32], index: 2, kind: input, shape index: {}]
  %s3 = inlined_call_operand.hbm [shape: f32[32,64], index: 3, kind: input, shape index: {}]
  %s4 = inlined_call_operand.vmem [shape: f32[1,64], index: 4, kind: input, shape index: {}]
  %s5 = inlined_call_operand.hbm [shape: f32[64,128], index: 5, kind: input, shape index: {}]
  %s6 = inlined_call_operand.vmem [shape: f32[1,128], index: 6, kind: input, shape index: {}]
  %s7 = inlined_call_operand.hbm [shape: f32[128,256], index: 7, kind: input, shape index: {}]
  %s8 = inlined_call_operand.vmem [shape: f32[1,256], index: 8, kind: input, shape index: {}]
  %s9 = inlined_call_operand.hbm [shape: f32[256,512], index: 9, kind: input, shape index: {}]
  %s10 = inlined_call_operand.vmem [shape: f32[1,512], index: 10, kind: input, shape index: {}]
  %s11 = inlined_call_operand.hbm [shape: f32[512,128], index: 11, kind: input, shape index: {}]
  %s12 = inlined_call_operand.vmem [shape: f32[1,128], index: 12, kind: input, shape index: {}]
  %s13 = inlined_call_operand.hbm [shape: f32[8,128], index: 13, kind: output, shape index: {}]
  %s14 = sld [smem:[#allocation0]]
  $region82: #{tpu_custom_call.1} parent=0
    _
  %s16 = ssub.s32 1, %s14
  %s17 = scalar_select 0, %s16, %s14
  $region1: #{tpu_custom_call.1} parent=0
    #allocation2 [shape = 'u8[16384]{0}', space=vmem, size = 0x4000, scoped, tag = 'input window, operand 3, single buffered']
    #allocation3 [shape = 's32[1]{0}', space=sflag, size = 0x4, scoped, tag = 'scoped memory for tpu_custom_call.1']
    #allocation4 [shape = 's32[1]{0}', space=sflag, size = 0x4, scoped, tag = 'scoped memory for tpu_custom_call.1']
    #allocation5 [shape = 'u8[32768]{0}', space=vmem, size = 0x8000, scoped, tag = 'input window, operand 5, single buffered']
    #allocation6 [shape = 's32[1]{0}', space=sflag, size = 0x4, scoped, tag = 'scoped memory for tpu_custom_call.1']
    #allocation7 [shape = 'u8[131072]{0}', space=vmem, size = 0x20000, scoped, tag = 'input window, operand 7, single buffered']
    #allocation8 [shape = 'u8[524288]{0}', space=vmem, size = 0x80000, scoped, tag = 'input window, operand 9, single buffered']
    #allocation9 [shape = 's32[1]{0}', space=sflag, size = 0x4, scoped, tag = 'scoped memory for tpu_custom_call.1']
    #allocation10 [shape = 'u8[262144]{0}', space=vmem, size = 0x40000, scoped, tag = 'input window, operand 11, single buffered']
    #allocation11 [shape = 'u8[4096]{0}', space=vmem, size = 0x1000, scoped, tag = 'output window, operand 0, single buffered']
    %18 = vsyncpa [#allocation3], 0
    %19 = vsyncpa [#allocation6], 0
    %20 = vsyncpa [#allocation9], 0
    %21 = vsyncpa [#allocation4], 0
    // Predicated region
    $region2: #{tpu_custom_call.1} parent=1 // pred_check
      _
    $region3: #{tpu_custom_call.1} parent=1 // pred_check_branch
      %23 = sbr.rel (0) target = $region5
    $region4: #{tpu_custom_call.1} parent=1 // pred_region
      _
    $region5: #{tpu_custom_call.1} parent=1 // pred_fallthru
      _
    // Predicated region
    $region6: #{tpu_custom_call.1} parent=1 // pred_check
      _
    $region7: #{tpu_custom_call.1} parent=1 // pred_check_branch
      %25 = sbr.rel (0) target = $region9
    $region8: #{tpu_custom_call.1} parent=1 // pred_region
      _
    $region9: #{tpu_custom_call.1} parent=1 // pred_fallthru
      _
    // Predicated region
    $region10: #{tpu_custom_call.1} parent=1 // pred_check
      _
    $region11: #{tpu_custom_call.1} parent=1 // pred_check_branch
      %27 = sbr.rel (0) target = $region13
    $region12: #{tpu_custom_call.1} parent=1 // pred_region
      _
    $region13: #{tpu_custom_call.1} parent=1 // pred_fallthru
      _
    // Predicated region
    $region14: #{tpu_custom_call.1} parent=1 // pred_check
      _
    $region15: #{tpu_custom_call.1} parent=1 // pred_check_branch
      %29 = sbr.rel (0) target = $region17
    $region16: #{tpu_custom_call.1} parent=1 // pred_region
      %s31 = ssub.s32 512, 512
      %32 = vsyncadd [#allocation3], %s31
      %s33 = sshll.u32 [#allocation2], 4
      %s34 = int_to_ptr.vmem [resolvable:$true] %s33
      %39 = dma.hbm_to_vmem [thread:$0]  %s3, 512, %s34, [#allocation3], 128, 128, 8
    $region17: #{tpu_custom_call.1} parent=1 // pred_fallthru
      _
    // Predicated region
    $region18: #{tpu_custom_call.1} parent=1 // pred_check
      _
    $region19: #{tpu_custom_call.1} parent=1 // pred_check_branch
      %41 = sbr.rel (0) target = $region21
    $region20: #{tpu_custom_call.1} parent=1 // pred_region
      _
    $region21: #{tpu_custom_call.1} parent=1 // pred_fallthru
      _
    // Predicated region
    $region22: #{tpu_custom_call.1} parent=1 // pred_check
      _
    $region23: #{tpu_custom_call.1} parent=1 // pred_check_branch
      %43 = sbr.rel (0) target = $region25
    $region24: #{tpu_custom_call.1} parent=1 // pred_region
      %s45 = ssub.s32 1024, 1024
      %46 = vsyncadd [#allocation6], %s45
      %s47 = sshll.u32 [#allocation5], 4
      %s48 = int_to_ptr.vmem [resolvable:$true] %s47
      %53 = dma.hbm_to_vmem [thread:$0]  %s5, 1024, %s48, [#allocation6], 128, 128, 8
    $region25: #{tpu_custom_call.1} parent=1 // pred_fallthru
      _
    // Predicated region
    $region26: #{tpu_custom_call.1} parent=1 // pred_check
      _
    $region27: #{tpu_custom_call.1} parent=1 // pred_check_branch
      %55 = sbr.rel (0) target = $region29
    $region28: #{tpu_custom_call.1} parent=1 // pred_region
      _
    $region29: #{tpu_custom_call.1} parent=1 // pred_fallthru
      _
    // Predicated region
    $region30: #{tpu_custom_call.1} parent=1 // pred_check
      _
    $region31: #{tpu_custom_call.1} parent=1 // pred_check_branch
      %57 = sbr.rel (0) target = $region33
    $region32: #{tpu_custom_call.1} parent=1 // pred_region
      %s59 = ssub.s32 4096, 4096
      %60 = vsyncadd [#allocation6], %s59
      %s61 = sshll.u32 [#allocation7], 4
      %s62 = int_to_ptr.vmem [resolvable:$true] %s61
      %67 = dma.hbm_to_vmem [thread:$0]  %s7, 4096, %s62, [#allocation6], 256, 256, 16
    $region33: #{tpu_custom_call.1} parent=1 // pred_fallthru
      _
    // Predicated region
    $region34: #{tpu_custom_call.1} parent=1 // pred_check
      _
    $region35: #{tpu_custom_call.1} parent=1 // pred_check_branch
      %69 = sbr.rel (0) target = $region37
    $region36: #{tpu_custom_call.1} parent=1 // pred_region
      _
    $region37: #{tpu_custom_call.1} parent=1 // pred_fallthru
      _
    // Predicated region
    $region38: #{tpu_custom_call.1} parent=1 // pred_check
      _
    $region39: #{tpu_custom_call.1} parent=1 // pred_check_branch
      %71 = sbr.rel (0) target = $region41
    $region40: #{tpu_custom_call.1} parent=1 // pred_region
      %s73 = ssub.s32 16384, 16384
      %74 = vsyncadd [#allocation9], %s73
      %s75 = sshll.u32 [#allocation8], 4
      %s76 = int_to_ptr.vmem [resolvable:$true] %s75
      %81 = dma.hbm_to_vmem [thread:$0]  %s9, 16384, %s76, [#allocation9], 512, 512, 32
    $region41: #{tpu_custom_call.1} parent=1 // pred_fallthru
      _
    // Predicated region
    $region42: #{tpu_custom_call.1} parent=1 // pred_check
      _
    $region43: #{tpu_custom_call.1} parent=1 // pred_check_branch
      %83 = sbr.rel (0) target = $region45
    $region44: #{tpu_custom_call.1} parent=1 // pred_region
      _
    $region45: #{tpu_custom_call.1} parent=1 // pred_fallthru
      _
    // Predicated region
    $region46: #{tpu_custom_call.1} parent=1 // pred_check
      _
    $region47: #{tpu_custom_call.1} parent=1 // pred_check_branch
      %85 = sbr.rel (0) target = $region49
    $region48: #{tpu_custom_call.1} parent=1 // pred_region
      %s87 = ssub.s32 8192, 8192
      %88 = vsyncadd [#allocation9], %s87
      %s89 = sshll.u32 [#allocation10], 4
      %s90 = int_to_ptr.vmem [resolvable:$true] %s89
      %95 = dma.hbm_to_vmem [thread:$0]  %s11, 8192, %s90, [#allocation9], 128, 128, 8
    $region49: #{tpu_custom_call.1} parent=1 // pred_fallthru
      _
    // Predicated region
    $region50: #{tpu_custom_call.1} parent=1 // pred_check
      _
    $region51: #{tpu_custom_call.1} parent=1 // pred_check_branch
      %97 = sbr.rel (0) target = $region53
    $region52: #{tpu_custom_call.1} parent=1 // pred_region
      _
    $region53: #{tpu_custom_call.1} parent=1 // pred_fallthru
      _
    // Predicated region
    $region54: #{tpu_custom_call.1} parent=1 // pred_check
      _
    $region55: #{tpu_custom_call.1} parent=1 // pred_check_branch
      %99 = sbr.rel (0) target = $region57
    $region56: #{tpu_custom_call.1} parent=1 // pred_region
      %100 = dma.done [#allocation3], 512
    $region57: #{tpu_custom_call.1} parent=1 // pred_fallthru
      _
    // Predicated region
    $region58: #{tpu_custom_call.1} parent=1 // pred_check
      _
    $region59: #{tpu_custom_call.1} parent=1 // pred_check_branch
      %102 = sbr.rel (0) target = $region61
    $region60: #{tpu_custom_call.1} parent=1 // pred_region
      %103 = dma.done [#allocation6], 1024
    $region61: #{tpu_custom_call.1} parent=1 // pred_fallthru
      _
    // Predicated region
    $region62: #{tpu_custom_call.1} parent=1 // pred_check
      _
    $region63: #{tpu_custom_call.1} parent=1 // pred_check_branch
      %105 = sbr.rel (0) target = $region65
    $region64: #{tpu_custom_call.1} parent=1 // pred_region
      %106 = dma.done [#allocation6], 4096
    $region65: #{tpu_custom_call.1} parent=1 // pred_fallthru
      _
    // Predicated region
    $region66: #{tpu_custom_call.1} parent=1 // pred_check
      _
    $region67: #{tpu_custom_call.1} parent=1 // pred_check_branch
      %108 = sbr.rel (0) target = $region69
    $region68: #{tpu_custom_call.1} parent=1 // pred_region
      %109 = dma.done [#allocation9], 16384
    $region69: #{tpu_custom_call.1} parent=1 // pred_fallthru
      _
    // Predicated region
    $region70: #{tpu_custom_call.1} parent=1 // pred_check
      _
    $region71: #{tpu_custom_call.1} parent=1 // pred_check_branch
      %111 = sbr.rel (0) target = $region73
    $region72: #{tpu_custom_call.1} parent=1 // pred_region
      %112 = dma.done [#allocation9], 8192
    $region73: #{tpu_custom_call.1} parent=1 // pred_fallthru
      _
    %v113 = vld [vmem:[%s0] sm:$0xff]
    %v114 = vld [vmem:[%s1] sm:$0x7]
    %v115 = vld [vmem:[%s2] sm:$0x1]
    %v117 = vlaneseq
    %v118 = vshrl.u32 %v117, 7
    %v119 = vsub.s32 0, %v118
    %v120 = vrot.slane %v115, %v119
    %vm122 = vcmask 23552
    %v124 = vsel %vm122, %v113, 0
    %vm126 = vcmask 1042432
    %v128 = vsel %vm126, %v114, 0
    %130 = vmatprep.subr.mxu0 0.0
    %131 = vmatpush1.msra.mxu0 %v128
    %132 = vmatprep.subr.mxu0 0.0
    %133 = vmatpush1.msra.mxu0 0.0
    %134 = vmatprep.subr.mxu0 0.0
    %135 = vmatpush1.msra.mxu0 0.0
    %136 = vmatprep.subr.mxu0 0.0
    %137 = vmatpush1.msra.mxu0 0.0
    %138 = vmatprep.subr.mxu0 0.0
    %139 = vmatpush1.msra.mxu0 0.0
    %140 = vmatprep.subr.mxu0 0.0
    %141 = vmatpush1.msra.mxu0 0.0
    %142 = vmatprep.subr.mxu0 0.0
    %143 = vmatpush1.msra.mxu0 0.0
    %144 = vmatprep.subr.mxu0 0.0
    %145 = vmatpush1.msra.mxu0 0.0
    %146 = vmatprep.subr.mxu0 0.0
    %147 = vmatpush1.msra.mxu0 0.0
    %148 = vmatprep.subr.mxu0 0.0
    %149 = vmatpush1.msra.mxu0 0.0
    %150 = vmatprep.subr.mxu0 0.0
    %151 = vmatpush1.msra.mxu0 0.0
    %152 = vmatprep.subr.mxu0 0.0
    %153 = vmatpush1.msra.mxu0 0.0
    %154 = vmatprep.subr.mxu0 0.0
    %155 = vmatpush1.msra.mxu0 0.0
    %156 = vmatprep.subr.mxu0 0.0
    %157 = vmatpush1.msra.mxu0 0.0
    %158 = vmatprep.subr.mxu0 0.0
    %159 = vmatpush1.msra.mxu0 0.0
    %160 = vmatprep.subr.mxu0 0.0
    %161 = vmatpush1.msra.mxu0 0.0
    %162 = vmatprep.subr.mxu0 0.0
    %163 = vmatpush1.msra.mxu0 0.0
    %164 = vmatprep.subr.mxu0 0.0
    %165 = vmatpush1.msra.mxu0 0.0
    %166 = vmatprep.subr.mxu0 0.0
    %167 = vmatpush1.msra.mxu0 0.0
    %168 = vmatprep.subr.mxu0 0.0
    %169 = vmatpush1.msra.mxu0 0.0
    %170 = vmatprep.subr.mxu0 0.0
    %171 = vmatpush1.msra.mxu0 0.0
    %172 = vmatprep.subr.mxu0 0.0
    %173 = vmatpush1.msra.mxu0 0.0
    %174 = vmatprep.subr.mxu0 0.0
    %175 = vmatpush1.msra.mxu0 0.0
    %176 = vmatprep.subr.mxu0 0.0
    %177 = vmatpush1.msra.mxu0 0.0
    %178 = vmatprep.subr.mxu0 0.0
    %179 = vmatpush1.msra.mxu0 0.0
    %180 = vmatprep.subr.mxu0 0.0
    %181 = vmatpush1.msra.mxu0 0.0
    %182 = vmatprep.subr.mxu0 0.0
    %183 = vmatpush1.msra.mxu0 0.0
    %184 = vmatprep.subr.mxu0 0.0
    %185 = vmatpush1.msra.mxu0 0.0
    %186 = vmatprep.subr.mxu0 0.0
    %187 = vmatpush1.msra.mxu0 0.0
    %188 = vmatprep.subr.mxu0 0.0
    %189 = vmatpush1.msra.mxu0 0.0
    %190 = vmatprep.subr.mxu0 0.0
    %191 = vmatpush1.msra.mxu0 0.0
    %192 = vmatprep.subr.mxu0 0.0
    %193 = vmatpush1.msra.mxu0 0.0
    %194 = vmatprep.mubr.f32.mxu0 0.0
    %195 = vmatmul.mubr.f32.gmra.mrb[0].mxu0 %v124
    %v196 = vpop.f32.mrb[0].mxu0
    %v197 = vadd.f32 %v120, %v196
    %v198 = vpop.f32.mrb[0].mxu0
    %199 = vdwg.mxu0
    %v200 = vmul.f32 %v197, %v197
    %v201 = vmul.f32 %v197, %v200
    %v202 = vmul.f32 %v201, 0.044715
    %v203 = vadd.f32 %v197, %v202
    %v204 = vmul.f32 %v203, 0.7978846
    %v205 = vtanh.pop %v204
    %v206 = vadd.f32 %v205, 1.0
    %v207 = vmul.f32 %v206, 0.5
    %v208 = vmul.f32 %v197, %v207
    %v209 = vld [vmem:[#allocation2] sm:$0xff]
    %v210 = vld [vmem:[#allocation2 + $0x8] sm:$0xff]
    %v211 = vld [vmem:[#allocation2 + $0x10] sm:$0xff]
    %v212 = vld [vmem:[#allocation2 + $0x18] sm:$0xff]
    %v213 = vld [vmem:[%s4] sm:$0x1]
    %v215 = vlaneseq
    %v216 = vshrl.u32 %v215, 7
    %v217 = vsub.s32 0, %v216
    %v218 = vrot.slane %v213, %v217
    %vm220 = vcmask 261120
    %v222 = vsel %vm220, %v208, 0
    %224 = vmatprep.subr.mxu0 0.0
    %225 = vmatpush1.msra.mxu0 %v209
    %226 = vmatprep.subr.mxu0 0.0
    %227 = vmatpush1.msra.mxu0 %v210
    %228 = vmatprep.subr.mxu0 0.0
    %229 = vmatpush1.msra.mxu0 %v211
    %230 = vmatprep.subr.mxu0 0.0
    %231 = vmatpush1.msra.mxu0 %v212
    %232 = vmatprep.subr.mxu0 0.0
    %233 = vmatpush1.msra.mxu0 0.0
    %234 = vmatprep.subr.mxu0 0.0
    %235 = vmatpush1.msra.mxu0 0.0
    %236 = vmatprep.subr.mxu0 0.0
    %237 = vmatpush1.msra.mxu0 0.0
    %238 = vmatprep.subr.mxu0 0.0
    %239 = vmatpush1.msra.mxu0 0.0
    %240 = vmatprep.subr.mxu0 0.0
    %241 = vmatpush1.msra.mxu0 0.0
    %242 = vmatprep.subr.mxu0 0.0
    %243 = vmatpush1.msra.mxu0 0.0
    %244 = vmatprep.subr.mxu0 0.0
    %245 = vmatpush1.msra.mxu0 0.0
    %246 = vmatprep.subr.mxu0 0.0
    %247 = vmatpush1.msra.mxu0 0.0
    %248 = vmatprep.subr.mxu0 0.0
    %249 = vmatpush1.msra.mxu0 0.0
    %250 = vmatprep.subr.mxu0 0.0
    %251 = vmatpush1.msra.mxu0 0.0
    %252 = vmatprep.subr.mxu0 0.0
    %253 = vmatpush1.msra.mxu0 0.0
    %254 = vmatprep.subr.mxu0 0.0
    %255 = vmatpush1.msra.mxu0 0.0
    %256 = vmatprep.subr.mxu0 0.0
    %257 = vmatpush1.msra.mxu0 0.0
    %258 = vmatprep.subr.mxu0 0.0
    %259 = vmatpush1.msra.mxu0 0.0
    %260 = vmatprep.subr.mxu0 0.0
    %261 = vmatpush1.msra.mxu0 0.0
    %262 = vmatprep.subr.mxu0 0.0
    %263 = vmatpush1.msra.mxu0 0.0
    %264 = vmatprep.subr.mxu0 0.0
    %265 = vmatpush1.msra.mxu0 0.0
    %266 = vmatprep.subr.mxu0 0.0
    %267 = vmatpush1.msra.mxu0 0.0
    %268 = vmatprep.subr.mxu0 0.0
    %269 = vmatpush1.msra.mxu0 0.0
    %270 = vmatprep.subr.mxu0 0.0
    %271 = vmatpush1.msra.mxu0 0.0
    %272 = vmatprep.subr.mxu0 0.0
    %273 = vmatpush1.msra.mxu0 0.0
    %274 = vmatprep.subr.mxu0 0.0
    %275 = vmatpush1.msra.mxu0 0.0
    %276 = vmatprep.subr.mxu0 0.0
    %277 = vmatpush1.msra.mxu0 0.0
    %278 = vmatprep.subr.mxu0 0.0
    %279 = vmatpush1.msra.mxu0 0.0
    %280 = vmatprep.subr.mxu0 0.0
    %281 = vmatpush1.msra.mxu0 0.0
    %282 = vmatprep.subr.mxu0 0.0
    %283 = vmatpush1.msra.mxu0 0.0
    %284 = vmatprep.subr.mxu0 0.0
    %285 = vmatpush1.msra.mxu0 0.0
    %286 = vmatprep.subr.mxu0 0.0
    %287 = vmatpush1.msra.mxu0 0.0
    %288 = vmatprep.mubr.f32.mxu0 0.0
    %289 = vmatmul.mubr.f32.gmra.mrb[0].mxu0 %v222
    %v290 = vpop.f32.mrb[0].mxu0
    %v291 = vadd.f32 %v218, %v290
    %v292 = vpop.f32.mrb[0].mxu0
    %293 = vdwg.mxu0
    %v294 = vmul.f32 %v291, %v291
    %v295 = vmul.f32 %v291, %v294
    %v296 = vmul.f32 %v295, 0.044715
    %v297 = vadd.f32 %v291, %v296
    %v298 = vmul.f32 %v297, 0.7978846
    %v299 = vtanh.pop %v298
    %v300 = vadd.f32 %v299, 1.0
    %v301 = vmul.f32 %v300, 0.5
    %v302 = vmul.f32 %v291, %v301
    %v303 = vld [vmem:[#allocation5] sm:$0xff]
    %v304 = vld [vmem:[#allocation5 + $0x8] sm:$0xff]
    %v305 = vld [vmem:[#allocation5 + $0x10] sm:$0xff]
    %v306 = vld [vmem:[#allocation5 + $0x18] sm:$0xff]
    %v307 = vld [vmem:[#allocation5 + $0x20] sm:$0xff]
    %v308 = vld [vmem:[#allocation5 + $0x28] sm:$0xff]
    %v309 = vld [vmem:[#allocation5 + $0x30] sm:$0xff]
    %v310 = vld [vmem:[#allocation5 + $0x38] sm:$0xff]
    %v311 = vld [vmem:[%s6] sm:$0x1]
    %v313 = vlaneseq
    %v314 = vshrl.u32 %v313, 7
    %v315 = vsub.s32 0, %v314
    %v316 = vrot.slane %v311, %v315
    %vm318 = vcmask 523264
    %v320 = vsel %vm318, %v302, 0
    %322 = vmatprep.subr.mxu0 0.0
    %323 = vmatpush1.msra.mxu0 %v303
    %324 = vmatprep.subr.mxu0 0.0
    %325 = vmatpush1.msra.mxu0 %v304
    %326 = vmatprep.subr.mxu0 0.0
    %327 = vmatpush1.msra.mxu0 %v305
    %328 = vmatprep.subr.mxu0 0.0
    %329 = vmatpush1.msra.mxu0 %v306
    %330 = vmatprep.subr.mxu0 0.0
    %331 = vmatpush1.msra.mxu0 %v307
    %332 = vmatprep.subr.mxu0 0.0
    %333 = vmatpush1.msra.mxu0 %v308
    %334 = vmatprep.subr.mxu0 0.0
    %335 = vmatpush1.msra.mxu0 %v309
    %336 = vmatprep.subr.mxu0 0.0
    %337 = vmatpush1.msra.mxu0 %v310
    %338 = vmatprep.subr.mxu0 0.0
    %339 = vmatpush1.msra.mxu0 0.0
    %340 = vmatprep.subr.mxu0 0.0
    %341 = vmatpush1.msra.mxu0 0.0
    %342 = vmatprep.subr.mxu0 0.0
    %343 = vmatpush1.msra.mxu0 0.0
    %344 = vmatprep.subr.mxu0 0.0
    %345 = vmatpush1.msra.mxu0 0.0
    %346 = vmatprep.subr.mxu0 0.0
    %347 = vmatpush1.msra.mxu0 0.0
    %348 = vmatprep.subr.mxu0 0.0
    %349 = vmatpush1.msra.mxu0 0.0
    %350 = vmatprep.subr.mxu0 0.0
    %351 = vmatpush1.msra.mxu0 0.0
    %352 = vmatprep.subr.mxu0 0.0
    %353 = vmatpush1.msra.mxu0 0.0
    %354 = vmatprep.subr.mxu0 0.0
    %355 = vmatpush1.msra.mxu0 0.0
    %356 = vmatprep.subr.mxu0 0.0
    %357 = vmatpush1.msra.mxu0 0.0
    %358 = vmatprep.subr.mxu0 0.0
    %359 = vmatpush1.msra.mxu0 0.0
    %360 = vmatprep.subr.mxu0 0.0
    %361 = vmatpush1.msra.mxu0 0.0
    %362 = vmatprep.subr.mxu0 0.0
    %363 = vmatpush1.msra.mxu0 0.0
    %364 = vmatprep.subr.mxu0 0.0
    %365 = vmatpush1.msra.mxu0 0.0
    %366 = vmatprep.subr.mxu0 0.0
    %367 = vmatpush1.msra.mxu0 0.0
    %368 = vmatprep.subr.mxu0 0.0
    %369 = vmatpush1.msra.mxu0 0.0
    %370 = vmatprep.subr.mxu0 0.0
    %371 = vmatpush1.msra.mxu0 0.0
    %372 = vmatprep.subr.mxu0 0.0
    %373 = vmatpush1.msra.mxu0 0.0
    %374 = vmatprep.subr.mxu0 0.0
    %375 = vmatpush1.msra.mxu0 0.0
    %376 = vmatprep.subr.mxu0 0.0
    %377 = vmatpush1.msra.mxu0 0.0
    %378 = vmatprep.subr.mxu0 0.0
    %379 = vmatpush1.msra.mxu0 0.0
    %380 = vmatprep.subr.mxu0 0.0
    %381 = vmatpush1.msra.mxu0 0.0
    %382 = vmatprep.subr.mxu0 0.0
    %383 = vmatpush1.msra.mxu0 0.0
    %384 = vmatprep.subr.mxu0 0.0
    %385 = vmatpush1.msra.mxu0 0.0
    %386 = vmatprep.mubr.f32.mxu0 0.0
    %387 = vmatmul.mubr.f32.gmra.mrb[0].mxu0 %v320
    %v388 = vpop.f32.mrb[0].mxu0
    %v389 = vadd.f32 %v316, %v388
    %v390 = vpop.f32.mrb[0].mxu0
    %391 = vdwg.mxu0
    %v392 = vmul.f32 %v389, %v389
    %v393 = vmul.f32 %v389, %v392
    %v394 = vmul.f32 %v393, 0.044715
    %v395 = vadd.f32 %v389, %v394
    %v396 = vmul.f32 %v395, 0.7978846
    %v397 = vtanh.pop %v396
    %v398 = vadd.f32 %v397, 1.0
    %v399 = vmul.f32 %v398, 0.5
    %v400 = vmul.f32 %v389, %v399
    %v401 = vld [vmem:[#allocation7] sm:$0xff]
    %v402 = vld [vmem:[#allocation7 + $0x8] sm:$0xff]
    %v403 = vld [vmem:[#allocation7 + $0x10] sm:$0xff]
    %v404 = vld [vmem:[#allocation7 + $0x18] sm:$0xff]
    %v405 = vld [vmem:[#allocation7 + $0x20] sm:$0xff]
    %v406 = vld [vmem:[#allocation7 + $0x28] sm:$0xff]
    %v407 = vld [vmem:[#allocation7 + $0x30] sm:$0xff]
    %v408 = vld [vmem:[#allocation7 + $0x38] sm:$0xff]
    %v409 = vld [vmem:[#allocation7 + $0x40] sm:$0xff]
    %v410 = vld [vmem:[#allocation7 + $0x48] sm:$0xff]
    %v411 = vld [vmem:[#allocation7 + $0x50] sm:$0xff]
    %v412 = vld [vmem:[#allocation7 + $0x58] sm:$0xff]
    %v413 = vld [vmem:[#allocation7 + $0x60] sm:$0xff]
    %v414 = vld [vmem:[#allocation7 + $0x68] sm:$0xff]
    %v415 = vld [vmem:[#allocation7 + $0x70] sm:$0xff]
    %v416 = vld [vmem:[#allocation7 + $0x78] sm:$0xff]
    %v417 = vld [vmem:[#allocation7 + $0x80] sm:$0xff]
    %v418 = vld [vmem:[#allocation7 + $0x88] sm:$0xff]
    %v419 = vld [vmem:[#allocation7 + $0x90] sm:$0xff]
    %v420 = vld [vmem:[#allocation7 + $0x98] sm:$0xff]
    %v421 = vld [vmem:[#allocation7 + $0xa0] sm:$0xff]
    %v422 = vld [vmem:[#allocation7 + $0xa8] sm:$0xff]
    %v423 = vld [vmem:[#allocation7 + $0xb0] sm:$0xff]
    %v424 = vld [vmem:[#allocation7 + $0xb8] sm:$0xff]
    %v425 = vld [vmem:[#allocation7 + $0xc0] sm:$0xff]
    %v426 = vld [vmem:[#allocation7 + $0xc8] sm:$0xff]
    %v427 = vld [vmem:[#allocation7 + $0xd0] sm:$0xff]
    %v428 = vld [vmem:[#allocation7 + $0xd8] sm:$0xff]
    %v429 = vld [vmem:[#allocation7 + $0xe0] sm:$0xff]
    %v430 = vld [vmem:[#allocation7 + $0xe8] sm:$0xff]
    %v431 = vld [vmem:[#allocation7 + $0xf0] sm:$0xff]
    %v432 = vld [vmem:[#allocation7 + $0xf8] sm:$0xff]
    %v433 = vld [vmem:[%s8] sm:$0x3]
    %v435 = vlaneseq
    %v436 = vshrl.u32 %v435, 7
    %v437 = vsub.s32 0, %v436
    %v438 = vrot.slane %v433, %v437
    %v439 = vlaneseq
    %v440 = vshrl.u32 %v439, 7
    %v441 = vsub.s32 1, %v440
    %v442 = vrot.slane %v433, %v441
    %445 = vmatprep.subr.mxu0 %v402
    %446 = vmatpush1.msra.mxu0 %v401
    %447 = vmatprep.subr.mxu0 %v404
    %448 = vmatpush1.msra.mxu0 %v403
    %449 = vmatprep.subr.mxu0 %v406
    %450 = vmatpush1.msra.mxu0 %v405
    %451 = vmatprep.subr.mxu0 %v408
    %452 = vmatpush1.msra.mxu0 %v407
    %453 = vmatprep.subr.mxu0 %v410
    %454 = vmatpush1.msra.mxu0 %v409
    %455 = vmatprep.subr.mxu0 %v412
    %456 = vmatpush1.msra.mxu0 %v411
    %457 = vmatprep.subr.mxu0 %v414
    %458 = vmatpush1.msra.mxu0 %v413
    %459 = vmatprep.subr.mxu0 %v416
    %460 = vmatpush1.msra.mxu0 %v415
    %461 = vmatprep.subr.mxu0 %v418
    %462 = vmatpush1.msra.mxu0 %v417
    %463 = vmatprep.subr.mxu0 %v420
    %464 = vmatpush1.msra.mxu0 %v419
    %465 = vmatprep.subr.mxu0 %v422
    %466 = vmatpush1.msra.mxu0 %v421
    %467 = vmatprep.subr.mxu0 %v424
    %468 = vmatpush1.msra.mxu0 %v423
    %469 = vmatprep.subr.mxu0 %v426
    %470 = vmatpush1.msra.mxu0 %v425
    %471 = vmatprep.subr.mxu0 %v428
    %472 = vmatpush1.msra.mxu0 %v427
    %473 = vmatprep.subr.mxu0 %v430
    %474 = vmatpush1.msra.mxu0 %v429
    %475 = vmatprep.subr.mxu0 %v432
    %476 = vmatpush1.msra.mxu0 %v431
    %477 = vmatprep.subr.mxu0 0.0
    %478 = vmatpush1.msra.mxu0 0.0
    %479 = vmatprep.subr.mxu0 0.0
    %480 = vmatpush1.msra.mxu0 0.0
    %481 = vmatprep.subr.mxu0 0.0
    %482 = vmatpush1.msra.mxu0 0.0
    %483 = vmatprep.subr.mxu0 0.0
    %484 = vmatpush1.msra.mxu0 0.0
    %485 = vmatprep.subr.mxu0 0.0
    %486 = vmatpush1.msra.mxu0 0.0
    %487 = vmatprep.subr.mxu0 0.0
    %488 = vmatpush1.msra.mxu0 0.0
    %489 = vmatprep.subr.mxu0 0.0
    %490 = vmatpush1.msra.mxu0 0.0
    %491 = vmatprep.subr.mxu0 0.0
    %492 = vmatpush1.msra.mxu0 0.0
    %493 = vmatprep.subr.mxu0 0.0
    %494 = vmatpush1.msra.mxu0 0.0
    %495 = vmatprep.subr.mxu0 0.0
    %496 = vmatpush1.msra.mxu0 0.0
    %497 = vmatprep.subr.mxu0 0.0
    %498 = vmatpush1.msra.mxu0 0.0
    %499 = vmatprep.subr.mxu0 0.0
    %500 = vmatpush1.msra.mxu0 0.0
    %501 = vmatprep.subr.mxu0 0.0
    %502 = vmatpush1.msra.mxu0 0.0
    %503 = vmatprep.subr.mxu0 0.0
    %504 = vmatpush1.msra.mxu0 0.0
    %505 = vmatprep.subr.mxu0 0.0
    %506 = vmatpush1.msra.mxu0 0.0
    %507 = vmatprep.subr.mxu0 0.0
    %508 = vmatpush1.msra.mxu0 0.0
    %509 = vmatprep.mubr.f32.mxu0 0.0
    %510 = vmatmul.mubr.f32.gmra.mrb[0].mxu0 %v400
    %v511 = vpop.f32.mrb[0].mxu0
    %v512 = vadd.f32 %v438, %v511
    %v513 = vpop.f32.mrb[0].mxu0
    %v514 = vadd.f32 %v442, %v513
    %515 = vdwg.mxu0
    %v516 = vmul.f32 %v512, %v512
    %v517 = vmul.f32 %v514, %v514
    %v518 = vmul.f32 %v512, %v516
    %v519 = vmul.f32 %v514, %v517
    %v520 = vmul.f32 %v518, 0.044715
    %v521 = vmul.f32 %v519, 0.044715
    %v522 = vadd.f32 %v512, %v520
    %v523 = vadd.f32 %v514, %v521
    %v524 = vmul.f32 %v522, 0.7978846
    %v525 = vmul.f32 %v523, 0.7978846
    %v526 = vtanh.pop %v524
    %v527 = vtanh.pop %v525
    %v528 = vadd.f32 %v526, 1.0
    %v529 = vadd.f32 %v527, 1.0
    %v530 = vmul.f32 %v528, 0.5
    %v531 = vmul.f32 %v529, 0.5
    %v532 = vmul.f32 %v512, %v530
    %v533 = vmul.f32 %v514, %v531
    %v534 = vld [vmem:[#allocation8] sm:$0xff]
    %v535 = vld [vmem:[#allocation8 + $0x8] sm:$0xff]
    %v536 = vld [vmem:[#allocation8 + $0x10] sm:$0xff]
    %v537 = vld [vmem:[#allocation8 + $0x18] sm:$0xff]
    %v538 = vld [vmem:[#allocation8 + $0x20] sm:$0xff]
    %v539 = vld [vmem:[#allocation8 + $0x28] sm:$0xff]
    %v540 = vld [vmem:[#allocation8 + $0x30] sm:$0xff]
    %v541 = vld [vmem:[#allocation8 + $0x38] sm:$0xff]
    %v542 = vld [vmem:[#allocation8 + $0x40] sm:$0xff]
    %v543 = vld [vmem:[#allocation8 + $0x48] sm:$0xff]
    %v544 = vld [vmem:[#allocation8 + $0x50] sm:$0xff]
    %v545 = vld [vmem:[#allocation8 + $0x58] sm:$0xff]
    %v546 = vld [vmem:[#allocation8 + $0x60] sm:$0xff]
    %v547 = vld [vmem:[#allocation8 + $0x68] sm:$0xff]
    %v548 = vld [vmem:[#allocation8 + $0x70] sm:$0xff]
    %v549 = vld [vmem:[#allocation8 + $0x78] sm:$0xff]
    %v550 = vld [vmem:[#allocation8 + $0x80] sm:$0xff]
    %v551 = vld [vmem:[#allocation8 + $0x88] sm:$0xff]
    %v552 = vld [vmem:[#allocation8 + $0x90] sm:$0xff]
    %v553 = vld [vmem:[#allocation8 + $0x98] sm:$0xff]
    %v554 = vld [vmem:[#allocation8 + $0xa0] sm:$0xff]
    %v555 = vld [vmem:[#allocation8 + $0xa8] sm:$0xff]
    %v556 = vld [vmem:[#allocation8 + $0xb0] sm:$0xff]
    %v557 = vld [vmem:[#allocation8 + $0xb8] sm:$0xff]
    %v558 = vld [vmem:[#allocation8 + $0xc0] sm:$0xff]
    %v559 = vld [vmem:[#allocation8 + $0xc8] sm:$0xff]
    %v560 = vld [vmem:[#allocation8 + $0xd0] sm:$0xff]
    %v561 = vld [vmem:[#allocation8 + $0xd8] sm:$0xff]
    %v562 = vld [vmem:[#allocation8 + $0xe0] sm:$0xff]
    %v563 = vld [vmem:[#allocation8 + $0xe8] sm:$0xff]
    %v564 = vld [vmem:[#allocation8 + $0xf0] sm:$0xff]
    %v565 = vld [vmem:[#allocation8 + $0xf8] sm:$0xff]
    %v566 = vld [vmem:[#allocation8 + $0x100] sm:$0xff]
    %v567 = vld [vmem:[#allocation8 + $0x108] sm:$0xff]
    %v568 = vld [vmem:[#allocation8 + $0x110] sm:$0xff]
    %v569 = vld [vmem:[#allocation8 + $0x118] sm:$0xff]
    %v570 = vld [vmem:[#allocation8 + $0x120] sm:$0xff]
    %v571 = vld [vmem:[#allocation8 + $0x128] sm:$0xff]
    %v572 = vld [vmem:[#allocation8 + $0x130] sm:$0xff]
    %v573 = vld [vmem:[#allocation8 + $0x138] sm:$0xff]
    %v574 = vld [vmem:[#allocation8 + $0x140] sm:$0xff]
    %v575 = vld [vmem:[#allocation8 + $0x148] sm:$0xff]
    %v576 = vld [vmem:[#allocation8 + $0x150] sm:$0xff]
    %v577 = vld [vmem:[#allocation8 + $0x158] sm:$0xff]
    %v578 = vld [vmem:[#allocation8 + $0x160] sm:$0xff]
    %v579 = vld [vmem:[#allocation8 + $0x168] sm:$0xff]
    %v580 = vld [vmem:[#allocation8 + $0x170] sm:$0xff]
    %v581 = vld [vmem:[#allocation8 + $0x178] sm:$0xff]
    %v582 = vld [vmem:[#allocation8 + $0x180] sm:$0xff]
    %v583 = vld [vmem:[#allocation8 + $0x188] sm:$0xff]
    %v584 = vld [vmem:[#allocation8 + $0x190] sm:$0xff]
    %v585 = vld [vmem:[#allocation8 + $0x198] sm:$0xff]
    %v586 = vld [vmem:[#allocation8 + $0x1a0] sm:$0xff]
    %v587 = vld [vmem:[#allocation8 + $0x1a8] sm:$0xff]
    %v588 = vld [vmem:[#allocation8 + $0x1b0] sm:$0xff]
    %v589 = vld [vmem:[#allocation8 + $0x1b8] sm:$0xff]
    %v590 = vld [vmem:[#allocation8 + $0x1c0] sm:$0xff]
    %v591 = vld [vmem:[#allocation8 + $0x1c8] sm:$0xff]
    %v592 = vld [vmem:[#allocation8 + $0x1d0] sm:$0xff]
    %v593 = vld [vmem:[#allocation8 + $0x1d8] sm:$0xff]
    %v594 = vld [vmem:[#allocation8 + $0x1e0] sm:$0xff]
    %v595 = vld [vmem:[#allocation8 + $0x1e8] sm:$0xff]
    %v596 = vld [vmem:[#allocation8 + $0x1f0] sm:$0xff]
    %v597 = vld [vmem:[#allocation8 + $0x1f8] sm:$0xff]
    %v598 = vld [vmem:[#allocation8 + $0x200] sm:$0xff]
    %v599 = vld [vmem:[#allocation8 + $0x208] sm:$0xff]
    %v600 = vld [vmem:[#allocation8 + $0x210] sm:$0xff]
    %v601 = vld [vmem:[#allocation8 + $0x218] sm:$0xff]
    %v602 = vld [vmem:[#allocation8 + $0x220] sm:$0xff]
    %v603 = vld [vmem:[#allocation8 + $0x228] sm:$0xff]
    %v604 = vld [vmem:[#allocation8 + $0x230] sm:$0xff]
    %v605 = vld [vmem:[#allocation8 + $0x238] sm:$0xff]
    %v606 = vld [vmem:[#allocation8 + $0x240] sm:$0xff]
    %v607 = vld [vmem:[#allocation8 + $0x248] sm:$0xff]
    %v608 = vld [vmem:[#allocation8 + $0x250] sm:$0xff]
    %v609 = vld [vmem:[#allocation8 + $0x258] sm:$0xff]
    %v610 = vld [vmem:[#allocation8 + $0x260] sm:$0xff]
    %v611 = vld [vmem:[#allocation8 + $0x268] sm:$0xff]
    %v612 = vld [vmem:[#allocation8 + $0x270] sm:$0xff]
    %v613 = vld [vmem:[#allocation8 + $0x278] sm:$0xff]
    %v614 = vld [vmem:[#allocation8 + $0x280] sm:$0xff]
    %v615 = vld [vmem:[#allocation8 + $0x288] sm:$0xff]
    %v616 = vld [vmem:[#allocation8 + $0x290] sm:$0xff]
    %v617 = vld [vmem:[#allocation8 + $0x298] sm:$0xff]
    %v618 = vld [vmem:[#allocation8 + $0x2a0] sm:$0xff]
    %v619 = vld [vmem:[#allocation8 + $0x2a8] sm:$0xff]
    %v620 = vld [vmem:[#allocation8 + $0x2b0] sm:$0xff]
    %v621 = vld [vmem:[#allocation8 + $0x2b8] sm:$0xff]
    %v622 = vld [vmem:[#allocation8 + $0x2c0] sm:$0xff]
    %v623 = vld [vmem:[#allocation8 + $0x2c8] sm:$0xff]
    %v624 = vld [vmem:[#allocation8 + $0x2d0] sm:$0xff]
    %v625 = vld [vmem:[#allocation8 + $0x2d8] sm:$0xff]
    %v626 = vld [vmem:[#allocation8 + $0x2e0] sm:$0xff]
    %v627 = vld [vmem:[#allocation8 + $0x2e8] sm:$0xff]
    %v628 = vld [vmem:[#allocation8 + $0x2f0] sm:$0xff]
    %v629 = vld [vmem:[#allocation8 + $0x2f8] sm:$0xff]
    %v630 = vld [vmem:[#allocation8 + $0x300] sm:$0xff]
    %v631 = vld [vmem:[#allocation8 + $0x308] sm:$0xff]
    %v632 = vld [vmem:[#allocation8 + $0x310] sm:$0xff]
    %v633 = vld [vmem:[#allocation8 + $0x318] sm:$0xff]
    %v634 = vld [vmem:[#allocation8 + $0x320] sm:$0xff]
    %v635 = vld [vmem:[#allocation8 + $0x328] sm:$0xff]
    %v636 = vld [vmem:[#allocation8 + $0x330] sm:$0xff]
    %v637 = vld [vmem:[#allocation8 + $0x338] sm:$0xff]
    %v638 = vld [vmem:[#allocation8 + $0x340] sm:$0xff]
    %v639 = vld [vmem:[#allocation8 + $0x348] sm:$0xff]
    %v640 = vld [vmem:[#allocation8 + $0x350] sm:$0xff]
    %v641 = vld [vmem:[#allocation8 + $0x358] sm:$0xff]
    %v642 = vld [vmem:[#allocation8 + $0x360] sm:$0xff]
    %v643 = vld [vmem:[#allocation8 + $0x368] sm:$0xff]
    %v644 = vld [vmem:[#allocation8 + $0x370] sm:$0xff]
    %v645 = vld [vmem:[#allocation8 + $0x378] sm:$0xff]
    %v646 = vld [vmem:[#allocation8 + $0x380] sm:$0xff]
    %v647 = vld [vmem:[#allocation8 + $0x388] sm:$0xff]
    %v648 = vld [vmem:[#allocation8 + $0x390] sm:$0xff]
    %v649 = vld [vmem:[#allocation8 + $0x398] sm:$0xff]
    %v650 = vld [vmem:[#allocation8 + $0x3a0] sm:$0xff]
    %v651 = vld [vmem:[#allocation8 + $0x3a8] sm:$0xff]
    %v652 = vld [vmem:[#allocation8 + $0x3b0] sm:$0xff]
    %v653 = vld [vmem:[#allocation8 + $0x3b8] sm:$0xff]
    %v654 = vld [vmem:[#allocation8 + $0x3c0] sm:$0xff]
    %v655 = vld [vmem:[#allocation8 + $0x3c8] sm:$0xff]
    %v656 = vld [vmem:[#allocation8 + $0x3d0] sm:$0xff]
    %v657 = vld [vmem:[#allocation8 + $0x3d8] sm:$0xff]
    %v658 = vld [vmem:[#allocation8 + $0x3e0] sm:$0xff]
    %v659 = vld [vmem:[#allocation8 + $0x3e8] sm:$0xff]
    %v660 = vld [vmem:[#allocation8 + $0x3f0] sm:$0xff]
    %v661 = vld [vmem:[#allocation8 + $0x3f8] sm:$0xff]
    %v662 = vld [vmem:[%s10] sm:$0xf]
    %v664 = vlaneseq
    %v665 = vshrl.u32 %v664, 7
    %v666 = vsub.s32 0, %v665
    %v667 = vrot.slane %v662, %v666
    %v668 = vlaneseq
    %v669 = vshrl.u32 %v668, 7
    %v670 = vsub.s32 1, %v669
    %v671 = vrot.slane %v662, %v670
    %v672 = vlaneseq
    %v673 = vshrl.u32 %v672, 7
    %v674 = vsub.s32 2, %v673
    %v675 = vrot.slane %v662, %v674
    %v676 = vlaneseq
    %v677 = vshrl.u32 %v676, 7
    %v678 = vsub.s32 3, %v677
    %v679 = vrot.slane %v662, %v678
    %684 = vmatprep.subr.mxu0 %v535
    %685 = vmatpush1.msra.mxu0 %v534
    %686 = vmatprep.subr.mxu0 %v539
    %687 = vmatpush1.msra.mxu0 %v538
    %688 = vmatprep.subr.mxu0 %v543
    %689 = vmatpush1.msra.mxu0 %v542
    %690 = vmatprep.subr.mxu0 %v547
    %691 = vmatpush1.msra.mxu0 %v546
    %692 = vmatprep.subr.mxu0 %v551
    %693 = vmatpush1.msra.mxu0 %v550
    %694 = vmatprep.subr.mxu0 %v555
    %695 = vmatpush1.msra.mxu0 %v554
    %696 = vmatprep.subr.mxu0 %v559
    %697 = vmatpush1.msra.mxu0 %v558
    %698 = vmatprep.subr.mxu0 %v563
    %699 = vmatpush1.msra.mxu0 %v562
    %700 = vmatprep.subr.mxu0 %v567
    %701 = vmatpush1.msra.mxu0 %v566
    %702 = vmatprep.subr.mxu0 %v571
    %703 = vmatpush1.msra.mxu0 %v570
    %704 = vmatprep.subr.mxu0 %v575
    %705 = vmatpush1.msra.mxu0 %v574
    %706 = vmatprep.subr.mxu0 %v579
    %707 = vmatpush1.msra.mxu0 %v578
    %708 = vmatprep.subr.mxu0 %v583
    %709 = vmatpush1.msra.mxu0 %v582
    %710 = vmatprep.subr.mxu0 %v587
    %711 = vmatpush1.msra.mxu0 %v586
    %712 = vmatprep.subr.mxu0 %v591
    %713 = vmatpush1.msra.mxu0 %v590
    %714 = vmatprep.subr.mxu0 %v595
    %715 = vmatpush1.msra.mxu0 %v594
    %716 = vmatprep.subr.mxu0 %v599
    %717 = vmatpush1.msra.mxu0 %v598
    %718 = vmatprep.subr.mxu0 %v603
    %719 = vmatpush1.msra.mxu0 %v602
    %720 = vmatprep.subr.mxu0 %v607
    %721 = vmatpush1.msra.mxu0 %v606
    %722 = vmatprep.subr.mxu0 %v611
    %723 = vmatpush1.msra.mxu0 %v610
    %724 = vmatprep.subr.mxu0 %v615
    %725 = vmatpush1.msra.mxu0 %v614
    %726 = vmatprep.subr.mxu0 %v619
    %727 = vmatpush1.msra.mxu0 %v618
    %728 = vmatprep.subr.mxu0 %v623
    %729 = vmatpush1.msra.mxu0 %v622
    %730 = vmatprep.subr.mxu0 %v627
    %731 = vmatpush1.msra.mxu0 %v626
    %732 = vmatprep.subr.mxu0 %v631
    %733 = vmatpush1.msra.mxu0 %v630
    %734 = vmatprep.subr.mxu0 %v635
    %735 = vmatpush1.msra.mxu0 %v634
    %736 = vmatprep.subr.mxu0 %v639
    %737 = vmatpush1.msra.mxu0 %v638
    %738 = vmatprep.subr.mxu0 %v643
    %739 = vmatpush1.msra.mxu0 %v642
    %740 = vmatprep.subr.mxu0 %v647
    %741 = vmatpush1.msra.mxu0 %v646
    %742 = vmatprep.subr.mxu0 %v651
    %743 = vmatpush1.msra.mxu0 %v650
    %744 = vmatprep.subr.mxu0 %v655
    %745 = vmatpush1.msra.mxu0 %v654
    %746 = vmatprep.subr.mxu0 %v659
    %747 = vmatpush1.msra.mxu0 %v658
    %748 = vmatprep.mubr.f32.mxu0 %v533
    %749 = vmatmul.mubr.f32.gmra.mrb[0].mxu0 %v532
    %v750 = vpop.f32.mrb[0].mxu0
    %v751 = vadd.f32 %v667, %v750
    %v752 = vpop.f32.mrb[0].mxu0
    %v753 = vadd.f32 %v671, %v752
    %754 = vdwg.mxu0
    %755 = vmatprep.subr.mxu0 %v537
    %756 = vmatpush1.msra.mxu0 %v536
    %757 = vmatprep.subr.mxu0 %v541
    %758 = vmatpush1.msra.mxu0 %v540
    %759 = vmatprep.subr.mxu0 %v545
    %760 = vmatpush1.msra.mxu0 %v544
    %761 = vmatprep.subr.mxu0 %v549
    %762 = vmatpush1.msra.mxu0 %v548
    %763 = vmatprep.subr.mxu0 %v553
    %764 = vmatpush1.msra.mxu0 %v552
    %765 = vmatprep.subr.mxu0 %v557
    %766 = vmatpush1.msra.mxu0 %v556
    %767 = vmatprep.subr.mxu0 %v561
    %768 = vmatpush1.msra.mxu0 %v560
    %769 = vmatprep.subr.mxu0 %v565
    %770 = vmatpush1.msra.mxu0 %v564
    %771 = vmatprep.subr.mxu0 %v569
    %772 = vmatpush1.msra.mxu0 %v568
    %773 = vmatprep.subr.mxu0 %v573
    %774 = vmatpush1.msra.mxu0 %v572
    %775 = vmatprep.subr.mxu0 %v577
    %776 = vmatpush1.msra.mxu0 %v576
    %777 = vmatprep.subr.mxu0 %v581
    %778 = vmatpush1.msra.mxu0 %v580
    %779 = vmatprep.subr.mxu0 %v585
    %780 = vmatpush1.msra.mxu0 %v584
    %781 = vmatprep.subr.mxu0 %v589
    %782 = vmatpush1.msra.mxu0 %v588
    %783 = vmatprep.subr.mxu0 %v593
    %784 = vmatpush1.msra.mxu0 %v592
    %785 = vmatprep.subr.mxu0 %v597
    %786 = vmatpush1.msra.mxu0 %v596
    %787 = vmatprep.subr.mxu0 %v601
    %788 = vmatpush1.msra.mxu0 %v600
    %789 = vmatprep.subr.mxu0 %v605
    %790 = vmatpush1.msra.mxu0 %v604
    %791 = vmatprep.subr.mxu0 %v609
    %792 = vmatpush1.msra.mxu0 %v608
    %793 = vmatprep.subr.mxu0 %v613
    %794 = vmatpush1.msra.mxu0 %v612
    %795 = vmatprep.subr.mxu0 %v617
    %796 = vmatpush1.msra.mxu0 %v616
    %797 = vmatprep.subr.mxu0 %v621
    %798 = vmatpush1.msra.mxu0 %v620
    %799 = vmatprep.subr.mxu0 %v625
    %800 = vmatpush1.msra.mxu0 %v624
    %801 = vmatprep.subr.mxu0 %v629
    %802 = vmatpush1.msra.mxu0 %v628
    %803 = vmatprep.subr.mxu0 %v633
    %804 = vmatpush1.msra.mxu0 %v632
    %805 = vmatprep.subr.mxu0 %v637
    %806 = vmatpush1.msra.mxu0 %v636
    %807 = vmatprep.subr.mxu0 %v641
    %808 = vmatpush1.msra.mxu0 %v640
    %809 = vmatprep.subr.mxu0 %v645
    %810 = vmatpush1.msra.mxu0 %v644
    %811 = vmatprep.subr.mxu0 %v649
    %812 = vmatpush1.msra.mxu0 %v648
    %813 = vmatprep.subr.mxu0 %v653
    %814 = vmatpush1.msra.mxu0 %v652
    %815 = vmatprep.subr.mxu0 %v657
    %816 = vmatpush1.msra.mxu0 %v656
    %817 = vmatprep.subr.mxu0 %v661
    %818 = vmatpush1.msra.mxu0 %v660
    %819 = vmatprep.mubr.f32.mxu0 %v533
    %820 = vmatmul.mubr.f32.gmra.mrb[0].mxu0 %v532
    %v821 = vpop.f32.mrb[0].mxu0
    %v822 = vadd.f32 %v675, %v821
    %v823 = vpop.f32.mrb[0].mxu0
    %v824 = vadd.f32 %v679, %v823
    %825 = vdwg.mxu0
    %v826 = vmul.f32 %v751, %v751
    %v827 = vmul.f32 %v753, %v753
    %v828 = vmul.f32 %v822, %v822
    %v829 = vmul.f32 %v824, %v824
    %v830 = vmul.f32 %v751, %v826
    %v831 = vmul.f32 %v753, %v827
    %v832 = vmul.f32 %v822, %v828
    %v833 = vmul.f32 %v824, %v829
    %v834 = vmul.f32 %v830, 0.044715
    %v835 = vmul.f32 %v831, 0.044715
    %v836 = vmul.f32 %v832, 0.044715
    %v837 = vmul.f32 %v833, 0.044715
    %v838 = vadd.f32 %v751, %v834
    %v839 = vadd.f32 %v753, %v835
    %v840 = vadd.f32 %v822, %v836
    %v841 = vadd.f32 %v824, %v837
    %v842 = vmul.f32 %v838, 0.7978846
    %v843 = vmul.f32 %v839, 0.7978846
    %v844 = vmul.f32 %v840, 0.7978846
    %v845 = vmul.f32 %v841, 0.7978846
    %v846 = vtanh.pop %v842
    %v847 = vtanh.pop %v843
    %v848 = vtanh.pop %v844
    %v849 = vtanh.pop %v845
    %v850 = vadd.f32 %v846, 1.0
    %v851 = vadd.f32 %v847, 1.0
    %v852 = vadd.f32 %v848, 1.0
    %v853 = vadd.f32 %v849, 1.0
    %v854 = vmul.f32 %v850, 0.5
    %v855 = vmul.f32 %v851, 0.5
    %v856 = vmul.f32 %v852, 0.5
    %v857 = vmul.f32 %v853, 0.5
    %v858 = vmul.f32 %v751, %v854
    %v859 = vmul.f32 %v753, %v855
    %v860 = vmul.f32 %v822, %v856
    %v861 = vmul.f32 %v824, %v857
    %v862 = vld [vmem:[#allocation10] sm:$0xff]
    %v863 = vld [vmem:[#allocation10 + $0x8] sm:$0xff]
    %v864 = vld [vmem:[#allocation10 + $0x10] sm:$0xff]
    %v865 = vld [vmem:[#allocation10 + $0x18] sm:$0xff]
    %v866 = vld [vmem:[#allocation10 + $0x20] sm:$0xff]
    %v867 = vld [vmem:[#allocation10 + $0x28] sm:$0xff]
    %v868 = vld [vmem:[#allocation10 + $0x30] sm:$0xff]
    %v869 = vld [vmem:[#allocation10 + $0x38] sm:$0xff]
    %v870 = vld [vmem:[#allocation10 + $0x40] sm:$0xff]
    %v871 = vld [vmem:[#allocation10 + $0x48] sm:$0xff]
    %v872 = vld [vmem:[#allocation10 + $0x50] sm:$0xff]
    %v873 = vld [vmem:[#allocation10 + $0x58] sm:$0xff]
    %v874 = vld [vmem:[#allocation10 + $0x60] sm:$0xff]
    %v875 = vld [vmem:[#allocation10 + $0x68] sm:$0xff]
    %v876 = vld [vmem:[#allocation10 + $0x70] sm:$0xff]
    %v877 = vld [vmem:[#allocation10 + $0x78] sm:$0xff]
    %v878 = vld [vmem:[#allocation10 + $0x80] sm:$0xff]
    %v879 = vld [vmem:[#allocation10 + $0x88] sm:$0xff]
    %v880 = vld [vmem:[#allocation10 + $0x90] sm:$0xff]
    %v881 = vld [vmem:[#allocation10 + $0x98] sm:$0xff]
    %v882 = vld [vmem:[#allocation10 + $0xa0] sm:$0xff]
    %v883 = vld [vmem:[#allocation10 + $0xa8] sm:$0xff]
    %v884 = vld [vmem:[#allocation10 + $0xb0] sm:$0xff]
    %v885 = vld [vmem:[#allocation10 + $0xb8] sm:$0xff]
    %v886 = vld [vmem:[#allocation10 + $0xc0] sm:$0xff]
    %v887 = vld [vmem:[#allocation10 + $0xc8] sm:$0xff]
    %v888 = vld [vmem:[#allocation10 + $0xd0] sm:$0xff]
    %v889 = vld [vmem:[#allocation10 + $0xd8] sm:$0xff]
    %v890 = vld [vmem:[#allocation10 + $0xe0] sm:$0xff]
    %v891 = vld [vmem:[#allocation10 + $0xe8] sm:$0xff]
    %v892 = vld [vmem:[#allocation10 + $0xf0] sm:$0xff]
    %v893 = vld [vmem:[#allocation10 + $0xf8] sm:$0xff]
    %v894 = vld [vmem:[#allocation10 + $0x100] sm:$0xff]
    %v895 = vld [vmem:[#allocation10 + $0x108] sm:$0xff]
    %v896 = vld [vmem:[#allocation10 + $0x110] sm:$0xff]
    %v897 = vld [vmem:[#allocation10 + $0x118] sm:$0xff]
    %v898 = vld [vmem:[#allocation10 + $0x120] sm:$0xff]
    %v899 = vld [vmem:[#allocation10 + $0x128] sm:$0xff]
    %v900 = vld [vmem:[#allocation10 + $0x130] sm:$0xff]
    %v901 = vld [vmem:[#allocation10 + $0x138] sm:$0xff]
    %v902 = vld [vmem:[#allocation10 + $0x140] sm:$0xff]
    %v903 = vld [vmem:[#allocation10 + $0x148] sm:$0xff]
    %v904 = vld [vmem:[#allocation10 + $0x150] sm:$0xff]
    %v905 = vld [vmem:[#allocation10 + $0x158] sm:$0xff]
    %v906 = vld [vmem:[#allocation10 + $0x160] sm:$0xff]
    %v907 = vld [vmem:[#allocation10 + $0x168] sm:$0xff]
    %v908 = vld [vmem:[#allocation10 + $0x170] sm:$0xff]
    %v909 = vld [vmem:[#allocation10 + $0x178] sm:$0xff]
    %v910 = vld [vmem:[#allocation10 + $0x180] sm:$0xff]
    %v911 = vld [vmem:[#allocation10 + $0x188] sm:$0xff]
    %v912 = vld [vmem:[#allocation10 + $0x190] sm:$0xff]
    %v913 = vld [vmem:[#allocation10 + $0x198] sm:$0xff]
    %v914 = vld [vmem:[#allocation10 + $0x1a0] sm:$0xff]
    %v915 = vld [vmem:[#allocation10 + $0x1a8] sm:$0xff]
    %v916 = vld [vmem:[#allocation10 + $0x1b0] sm:$0xff]
    %v917 = vld [vmem:[#allocation10 + $0x1b8] sm:$0xff]
    %v918 = vld [vmem:[#allocation10 + $0x1c0] sm:$0xff]
    %v919 = vld [vmem:[#allocation10 + $0x1c8] sm:$0xff]
    %v920 = vld [vmem:[#allocation10 + $0x1d0] sm:$0xff]
    %v921 = vld [vmem:[#allocation10 + $0x1d8] sm:$0xff]
    %v922 = vld [vmem:[#allocation10 + $0x1e0] sm:$0xff]
    %v923 = vld [vmem:[#allocation10 + $0x1e8] sm:$0xff]
    %v924 = vld [vmem:[#allocation10 + $0x1f0] sm:$0xff]
    %v925 = vld [vmem:[#allocation10 + $0x1f8] sm:$0xff]
    %v926 = vld [vmem:[%s12] sm:$0x1]
    %v928 = vlaneseq
    %v929 = vshrl.u32 %v928, 7
    %v930 = vsub.s32 0, %v929
    %v931 = vrot.slane %v926, %v930
    %933 = vmatprep.subr.mxu0 0.0
    %934 = vmatpush1.msra.mxu0 %v862
    %935 = vmatprep.subr.mxu0 0.0
    %936 = vmatpush1.msra.mxu0 %v863
    %937 = vmatprep.subr.mxu0 0.0
    %938 = vmatpush1.msra.mxu0 %v864
    %939 = vmatprep.subr.mxu0 0.0
    %940 = vmatpush1.msra.mxu0 %v865
    %941 = vmatprep.subr.mxu0 0.0
    %942 = vmatpush1.msra.mxu0 %v866
    %943 = vmatprep.subr.mxu0 0.0
    %944 = vmatpush1.msra.mxu0 %v867
    %945 = vmatprep.subr.mxu0 0.0
    %946 = vmatpush1.msra.mxu0 %v868
    %947 = vmatprep.subr.mxu0 0.0
    %948 = vmatpush1.msra.mxu0 %v869
    %949 = vmatprep.subr.mxu0 0.0
    %950 = vmatpush1.msra.mxu0 %v870
    %951 = vmatprep.subr.mxu0 0.0
    %952 = vmatpush1.msra.mxu0 %v871
    %953 = vmatprep.subr.mxu0 0.0
    %954 = vmatpush1.msra.mxu0 %v872
    %955 = vmatprep.subr.mxu0 0.0
    %956 = vmatpush1.msra.mxu0 %v873
    %957 = vmatprep.subr.mxu0 0.0
    %958 = vmatpush1.msra.mxu0 %v874
    %959 = vmatprep.subr.mxu0 0.0
    %960 = vmatpush1.msra.mxu0 %v875
    %961 = vmatprep.subr.mxu0 0.0
    %962 = vmatpush1.msra.mxu0 %v876
    %963 = vmatprep.subr.mxu0 0.0
    %964 = vmatpush1.msra.mxu0 %v877
    %965 = vmatprep.subr.mxu0 0.0
    %966 = vmatpush1.msra.mxu0 %v878
    %967 = vmatprep.subr.mxu0 0.0
    %968 = vmatpush1.msra.mxu0 %v879
    %969 = vmatprep.subr.mxu0 0.0
    %970 = vmatpush1.msra.mxu0 %v880
    %971 = vmatprep.subr.mxu0 0.0
    %972 = vmatpush1.msra.mxu0 %v881
    %973 = vmatprep.subr.mxu0 0.0
    %974 = vmatpush1.msra.mxu0 %v882
    %975 = vmatprep.subr.mxu0 0.0
    %976 = vmatpush1.msra.mxu0 %v883
    %977 = vmatprep.subr.mxu0 0.0
    %978 = vmatpush1.msra.mxu0 %v884
    %979 = vmatprep.subr.mxu0 0.0
    %980 = vmatpush1.msra.mxu0 %v885
    %981 = vmatprep.subr.mxu0 0.0
    %982 = vmatpush1.msra.mxu0 %v886
    %983 = vmatprep.subr.mxu0 0.0
    %984 = vmatpush1.msra.mxu0 %v887
    %985 = vmatprep.subr.mxu0 0.0
    %986 = vmatpush1.msra.mxu0 %v888
    %987 = vmatprep.subr.mxu0 0.0
    %988 = vmatpush1.msra.mxu0 %v889
    %989 = vmatprep.subr.mxu0 0.0
    %990 = vmatpush1.msra.mxu0 %v890
    %991 = vmatprep.subr.mxu0 0.0
    %992 = vmatpush1.msra.mxu0 %v891
    %993 = vmatprep.subr.mxu0 0.0
    %994 = vmatpush1.msra.mxu0 %v892
    %995 = vmatprep.subr.mxu0 0.0
    %996 = vmatpush1.msra.mxu0 %v893
    %997 = vmatprep.mubr.f32.mxu0 %v859
    %998 = vmatmul.mubr.f32.gmra.mrb[0].mxu0 %v858
    %v999 = vpop.f32.mrb[0].mxu0
    %v1000 = vadd.f32 %v931, %v999
    %v1001 = vpop.f32.mrb[0].mxu0
    %1002 = vdwg.mxu0
    %1003 = vmatprep.subr.mxu0 0.0
    %1004 = vmatpush1.msra.mxu0 %v894
    %1005 = vmatprep.subr.mxu0 0.0
    %1006 = vmatpush1.msra.mxu0 %v895
    %1007 = vmatprep.subr.mxu0 0.0
    %1008 = vmatpush1.msra.mxu0 %v896
    %1009 = vmatprep.subr.mxu0 0.0
    %1010 = vmatpush1.msra.mxu0 %v897
    %1011 = vmatprep.subr.mxu0 0.0
    %1012 = vmatpush1.msra.mxu0 %v898
    %1013 = vmatprep.subr.mxu0 0.0
    %1014 = vmatpush1.msra.mxu0 %v899
    %1015 = vmatprep.subr.mxu0 0.0
    %1016 = vmatpush1.msra.mxu0 %v900
    %1017 = vmatprep.subr.mxu0 0.0
    %1018 = vmatpush1.msra.mxu0 %v901
    %1019 = vmatprep.subr.mxu0 0.0
    %1020 = vmatpush1.msra.mxu0 %v902
    %1021 = vmatprep.subr.mxu0 0.0
    %1022 = vmatpush1.msra.mxu0 %v903
    %1023 = vmatprep.subr.mxu0 0.0
    %1024 = vmatpush1.msra.mxu0 %v904
    %1025 = vmatprep.subr.mxu0 0.0
    %1026 = vmatpush1.msra.mxu0 %v905
    %1027 = vmatprep.subr.mxu0 0.0
    %1028 = vmatpush1.msra.mxu0 %v906
    %1029 = vmatprep.subr.mxu0 0.0
    %1030 = vmatpush1.msra.mxu0 %v907
    %1031 = vmatprep.subr.mxu0 0.0
    %1032 = vmatpush1.msra.mxu0 %v908
    %1033 = vmatprep.subr.mxu0 0.0
    %1034 = vmatpush1.msra.mxu0 %v909
    %1035 = vmatprep.subr.mxu0 0.0
    %1036 = vmatpush1.msra.mxu0 %v910
    %1037 = vmatprep.subr.mxu0 0.0
    %1038 = vmatpush1.msra.mxu0 %v911
    %1039 = vmatprep.subr.mxu0 0.0
    %1040 = vmatpush1.msra.mxu0 %v912
    %1041 = vmatprep.subr.mxu0 0.0
    %1042 = vmatpush1.msra.mxu0 %v913
    %1043 = vmatprep.subr.mxu0 0.0
    %1044 = vmatpush1.msra.mxu0 %v914
    %1045 = vmatprep.subr.mxu0 0.0
    %1046 = vmatpush1.msra.mxu0 %v915
    %1047 = vmatprep.subr.mxu0 0.0
    %1048 = vmatpush1.msra.mxu0 %v916
    %1049 = vmatprep.subr.mxu0 0.0
    %1050 = vmatpush1.msra.mxu0 %v917
    %1051 = vmatprep.subr.mxu0 0.0
    %1052 = vmatpush1.msra.mxu0 %v918
    %1053 = vmatprep.subr.mxu0 0.0
    %1054 = vmatpush1.msra.mxu0 %v919
    %1055 = vmatprep.subr.mxu0 0.0
    %1056 = vmatpush1.msra.mxu0 %v920
    %1057 = vmatprep.subr.mxu0 0.0
    %1058 = vmatpush1.msra.mxu0 %v921
    %1059 = vmatprep.subr.mxu0 0.0
    %1060 = vmatpush1.msra.mxu0 %v922
    %1061 = vmatprep.subr.mxu0 0.0
    %1062 = vmatpush1.msra.mxu0 %v923
    %1063 = vmatprep.subr.mxu0 0.0
    %1064 = vmatpush1.msra.mxu0 %v924
    %1065 = vmatprep.subr.mxu0 0.0
    %1066 = vmatpush1.msra.mxu0 %v925
    %1067 = vmatprep.mubr.f32.mxu0 %v861
    %1068 = vmatmul.mubr.f32.gmra.mrb[0].mxu0 %v860
    %v1069 = vpop.f32.mrb[0].mxu0
    %v1070 = vadd.f32 %v1000, %v1069
    %v1071 = vpop.f32.mrb[0].mxu0
    %1072 = vdwg.mxu0
    %1073 = vst [vmem:[#allocation11] sm:$0xff] %v1070
    // Predicated region
    $region74: #{tpu_custom_call.1} parent=1 // pred_check
      _
    $region75: #{tpu_custom_call.1} parent=1 // pred_check_branch
      %1075 = sbr.rel (0) target = $region77
    $region76: #{tpu_custom_call.1} parent=1 // pred_region
      %s1077 = ssub.s32 128, 128
      %1078 = vsyncadd [#allocation4], %s1077
      %s1080 = sshll.u32 [#allocation11], 4
      %s1081 = int_to_ptr.vmem [resolvable:$true] %s1080
      %1083 = dma.vmem_to_hbm [thread:$0]  %s1081, 128, %s13, [#allocation4]
    $region77: #{tpu_custom_call.1} parent=1 // pred_fallthru
      _
    // Predicated region
    $region78: #{tpu_custom_call.1} parent=1 // pred_check
      _
    $region79: #{tpu_custom_call.1} parent=1 // pred_check_branch
      %1085 = sbr.rel (0) target = $region81
    $region80: #{tpu_custom_call.1} parent=1 // pred_region
      %1086 = dma.done [#allocation4], 128
    $region81: #{tpu_custom_call.1} parent=1 // pred_fallthru
      _
    %1087 = vsyncpa [#allocation3], 1
    %1088 = vsyncpa [#allocation6], 1
    %1089 = vsyncpa [#allocation9], 1
    %1090 = vsyncpa [#allocation4], 1

</llo_original>
